<compile_context>
chip_gen: v7x
topology: tpu7x:2x2x1
jax: 0.10.0
libtpu: 0.0.40
codegen_flags: <defaults>
</compile_context>

<pallas_src>
import functools

import jax
import jax.numpy as jnp
from jax.experimental import pallas as pl
from jax.experimental.pallas import tpu as pltpu


_INV_SQRT2 = 0.7071067811865476


def _ff_geglu_kernel(x_ref, w1h_ref, w1g_ref, b1h_ref, b1g_ref, w2_ref, b2_ref,
                     o_ref, acc_ref):
    # Grid: (token_tiles [parallel], inner_tiles [arbitrary / reduction])
    # x_ref:   (tile_m, dim)
    # w1h/w1g: (dim, tile_n)        b1h/b1g: (1, tile_n)
    # w2_ref:  (tile_n, dim_out)    b2_ref:  (1, dim_out)
    # o_ref:   (tile_m, dim_out)    acc_ref: (tile_m, dim_out) f32 scratch
    j = pl.program_id(1)

    @pl.when(j == 0)
    def _init():
        acc_ref[...] = jnp.zeros_like(acc_ref)

    x = x_ref[...]  # native dtype MXU operands, f32 accumulation
    h = jnp.dot(x, w1h_ref[...], preferred_element_type=jnp.float32)
    h = h + b1h_ref[...].astype(jnp.float32)
    g = jnp.dot(x, w1g_ref[...], preferred_element_type=jnp.float32)
    g = g + b1g_ref[...].astype(jnp.float32)

    # Exact GELU (F.gelu, approximate="none") in f32.
    gelu_g = 0.5 * g * (1.0 + jax.lax.erf(g * _INV_SQRT2))
    act = (h * gelu_g).astype(w2_ref.dtype)

    acc_ref[...] += jnp.dot(act, w2_ref[...], preferred_element_type=jnp.float32)

    @pl.when(j == pl.num_programs(1) - 1)
    def _finalize():
        o_ref[...] = (acc_ref[...] + b2_ref[...].astype(jnp.float32)).astype(o_ref.dtype)


def _round_up(x, m):
    return (x + m - 1) // m * m


@functools.partial(jax.jit, static_argnames=("tile_m", "tile_n"))
def feed_forward_geglu(x, w1, b1, w2, b2, *, tile_m=256, tile_n=512):
    """x: (B, S, dim) -> (B, S, dim_out). Weights stored as (in, out)."""
    B, S, dim = x.shape
    two_inner = w1.shape[1]
    inner = two_inner // 2
    dim_out = w2.shape[1]

    # Lane-dense tiles only (avoid masked vst.msk partial stores).
    assert dim % 128 == 0 and inner % 128 == 0 and dim_out % 128 == 0, (
        "dim / inner / dim_out must be multiples of 128")

    # GEGLU convention: first half of proj -> hidden, second half -> gate.
    w1h, w1g = w1[:, :inner], w1[:, inner:]
    b1h = b1[:inner].reshape(1, inner)
    b1g = b1[inner:].reshape(1, inner)
    b2_2d = b2.reshape(1, dim_out)

    # Token tiling: pad tokens up to a multiple of tile_m (no divisibility assert).
    n_tok = B * S
    tm = _round_up(min(tile_m, _round_up(n_tok, 8)), 8)
    n_pad = _round_up(n_tok, tm)
    x2d = x.reshape(n_tok, dim)
    if n_pad != n_tok:
        x2d = jnp.pad(x2d, ((0, n_pad - n_tok), (0, 0)))

    # Inner-axis tile: largest multiple of 128 <= tile_n that divides inner.
    tn = max(128, min(tile_n, inner))
    tn -= tn % 128
    while inner % tn != 0:
        tn -= 128

    grid = (n_pad // tm, inner // tn)

    out2d = pl.pallas_call(
        _ff_geglu_kernel,
        out_shape=jax.ShapeDtypeStruct((n_pad, dim_out), x.dtype),
        grid_spec=pltpu.PrefetchScalarGridSpec(
            num_scalar_prefetch=0,
            grid=grid,
            in_specs=[
                pl.BlockSpec((tm, dim), lambda i, j: (i, 0)),       # x (revisited over j)
                pl.BlockSpec((dim, tn), lambda i, j: (0, j)),       # W1 hidden half
                pl.BlockSpec((dim, tn), lambda i, j: (0, j)),       # W1 gate half
                pl.BlockSpec((1, tn), lambda i, j: (0, j)),         # b1 hidden half
                pl.BlockSpec((1, tn), lambda i, j: (0, j)),         # b1 gate half
                pl.BlockSpec((tn, dim_out), lambda i, j: (j, 0)),   # W2 (K tiled)
                pl.BlockSpec((1, dim_out), lambda i, j: (0, 0)),    # b2
            ],
            out_specs=pl.BlockSpec((tm, dim_out), lambda i, j: (i, 0)),
            scratch_shapes=[pltpu.VMEM((tm, dim_out), jnp.float32)],
        ),
        compiler_params=pltpu.CompilerParams(
            dimension_semantics=("parallel", "arbitrary"),
            vmem_limit_bytes=48 * 1024 * 1024,
        ),
    )(x2d, w1h, w1g, b1h, b1g, w2, b2_2d)

    if n_pad != n_tok:
        out2d = out2d[:n_tok]
    return out2d.reshape(B, S, dim_out)


def _reference(x, w1, b1, w2, b2):
    xf = x.astype(jnp.float32)
    h = xf @ w1.astype(jnp.float32) + b1.astype(jnp.float32)
    inner = h.shape[-1] // 2
    hidden, gate = h[..., :inner], h[..., inner:]
    act = hidden * (0.5 * gate * (1.0 + jax.lax.erf(gate / jnp.sqrt(2.0))))
    return act @ w2.astype(jnp.float32) + b2.astype(jnp.float32)


def _make_params(key, dim, inner, dim_out, dtype):
    k_w1, k_b1, k_w2, k_b2 = jax.random.split(key, 4)
    lim1 = 1.0 / jnp.sqrt(dim)
    lim2 = 1.0 / jnp.sqrt(inner)
    # nn.Linear-style init, stored transposed as (in, out) for the kernel.
    w1 = (jax.random.uniform(k_w1, (dim, 2 * inner), minval=-1.0, maxval=1.0) * lim1).astype(dtype)
    b1 = (jax.random.uniform(k_b1, (2 * inner,), minval=-1.0, maxval=1.0) * lim1).astype(dtype)
    w2 = (jax.random.uniform(k_w2, (inner, dim_out), minval=-1.0, maxval=1.0) * lim2).astype(dtype)
    b2 = (jax.random.uniform(k_b2, (dim_out,), minval=-1.0, maxval=1.0) * lim2).astype(dtype)
    return w1, b1, w2, b2


if __name__ == "__main__":
    # FeedForward(dim=128, mult=4, activation_fn="geglu") -> inner_dim = 512
    batch, seq, dim, mult = 2, 100, 128, 4
    inner = dim * mult
    dim_out = dim

    key = jax.random.PRNGKey(0)
    k_x, k_p = jax.random.split(key, 2)

    # --- check 1: f32 params, small tiles (exercises multi-step grid,
    #              reduction accumulation and tail-token padding) ---
    x32 = jax.random.normal(k_x, (batch, seq, dim), dtype=jnp.float32)
    p32 = _make_params(k_p, dim, inner, dim_out, jnp.float32)
    out32 = jax.block_until_ready(feed_forward_geglu(x32, *p32, tile_m=64, tile_n=128))
    ref32 = _reference(x32, *p32)
    assert out32.shape == (batch, seq, dim_out)
    assert jnp.allclose(out32, ref32, atol=1e-4, rtol=1e-4), "f32 mismatch vs reference"

    # --- check 2: bf16 params / activations (native bf16 MXU, f32 accum),
    #              default production-sized tiles ---
    xb = x32.astype(jnp.bfloat16)
    pb = tuple(p.astype(jnp.bfloat16) for p in p32)
    outb = jax.block_until_ready(feed_forward_geglu(xb, *pb))
    refb = _reference(xb, *pb)
    assert jnp.allclose(outb.astype(jnp.float32), refb, atol=5e-2, rtol=5e-2), \
        "bf16 mismatch vs reference"

    print("KERNEL_OK")
</pallas_src>

<mosaic_0001>
module attributes {stable_mosaic.version = 11 : i64} {
  func.func @_ff_geglu_kernel(%arg0: i32, %arg1: i32, %arg2: memref<64x128xf32, #tpu.memory_space<vmem>>, %arg3: memref<128x128xf32, #tpu.memory_space<vmem>>, %arg4: memref<128x128xf32, #tpu.memory_space<vmem>>, %arg5: memref<1x128xf32, #tpu.memory_space<vmem>>, %arg6: memref<1x128xf32, #tpu.memory_space<vmem>>, %arg7: memref<128x128xf32, #tpu.memory_space<vmem>>, %arg8: memref<1x128xf32, #tpu.memory_space<vmem>>, %arg9: memref<64x128xf32, #tpu.memory_space<vmem>>, %arg10: memref<64x128xf32, #tpu.memory_space<vmem>>) attributes {dimension_semantics = [#tpu.dimension_semantics<parallel>, #tpu.dimension_semantics<arbitrary>], iteration_bounds = array<i64: 4, 4>, scalar_prefetch = 0 : i64, scratch_operands = 1 : i64, tpu.core_type = #tpu.core_type<tc>, window_params = [{transform_indices = @transform_0, window_bounds = array<i64: 64, 128>}, {transform_indices = @transform_1, window_bounds = array<i64: 128, 128>}, {transform_indices = @transform_2, window_bounds = array<i64: 128, 128>}, {transform_indices = @transform_3, window_bounds = array<i64: 1, 128>}, {transform_indices = @transform_4, window_bounds = array<i64: 1, 128>}, {transform_indices = @transform_5, window_bounds = array<i64: 128, 128>}, {pipeline_mode = #tpu.pipeline_mode<synchronous>, transform_indices = @transform_6, window_bounds = array<i64: 1, 128>}, {transform_indices = @transform_7, window_bounds = array<i64: 64, 128>}]} {
    %c0_i32 = arith.constant 0 : i32
    %0 = arith.cmpi eq, %arg1, %c0_i32 : i32
    %1 = arith.extui %0 : i1 to i32
    %c0_i32_0 = arith.constant 0 : i32
    %2 = arith.cmpi ne, %1, %c0_i32_0 : i32
    scf.if %2 {
      %cst_22 = arith.constant 0.000000e+00 : f32
      %31 = vector.broadcast %cst_22 : f32 to vector<64x128xf32>
      %c0_23 = arith.constant 0 : index
      %c0_24 = arith.constant 0 : index
      %32 = vector.load %arg10[%c0_23, %c0_24] : memref<64x128xf32, #tpu.memory_space<vmem>>, vector<64x128xf32>
      tpu.vector_store %arg10[%c0_23, %c0_24], %31 {strides = array<i32>} : memref<64x128xf32, #tpu.memory_space<vmem>>, vector<64x128xf32>,
    } else {
    }
    %c0 = arith.constant 0 : index
    %c0_1 = arith.constant 0 : index
    %3 = vector.load %arg2[%c0, %c0_1] : memref<64x128xf32, #tpu.memory_space<vmem>>, vector<64x128xf32>
    %c0_2 = arith.constant 0 : index
    %c0_3 = arith.constant 0 : index
    %4 = vector.load %arg3[%c0_2, %c0_3] : memref<128x128xf32, #tpu.memory_space<vmem>>, vector<128x128xf32>
    %cst = arith.constant dense<0.000000e+00> : vector<64x128xf32>
    %5 = tpu.matmul %3, %4, %cst {dimension_numbers = #tpu.dot_dimension_numbers<[1], [0], [0], [1], [0, 0, 1, 1], [], []>} : vector<64x128xf32>, vector<128x128xf32>, vector<64x128xf32> -> vector<64x128xf32>
    %c0_4 = arith.constant 0 : index
    %c0_5 = arith.constant 0 : index
    %6 = vector.load %arg5[%c0_4, %c0_5] : memref<1x128xf32, #tpu.memory_space<vmem>>, vector<1x128xf32>
    %7 = vector.broadcast %6 : vector<1x128xf32> to vector<64x128xf32>
    %8 = arith.addf %5, %7 : vector<64x128xf32>
    %c0_6 = arith.constant 0 : index
    %c0_7 = arith.constant 0 : index
    %9 = vector.load %arg4[%c0_6, %c0_7] : memref<128x128xf32, #tpu.memory_space<vmem>>, vector<128x128xf32>
    %cst_8 = arith.constant dense<0.000000e+00> : vector<64x128xf32>
    %10 = tpu.matmul %3, %9, %cst_8 {dimension_numbers = #tpu.dot_dimension_numbers<[1], [0], [0], [1], [0, 0, 1, 1], [], []>} : vector<64x128xf32>, vector<128x128xf32>, vector<64x128xf32> -> vector<64x128xf32>
    %c0_9 = arith.constant 0 : index
    %c0_10 = arith.constant 0 : index
    %11 = vector.load %arg6[%c0_9, %c0_10] : memref<1x128xf32, #tpu.memory_space<vmem>>, vector<1x128xf32>
    %12 = vector.broadcast %11 : vector<1x128xf32> to vector<64x128xf32>
    %13 = arith.addf %10, %12 : vector<64x128xf32>
    %cst_11 = arith.constant 5.000000e-01 : f32
    %14 = vector.broadcast %cst_11 : f32 to vector<64x128xf32>
    %15 = arith.mulf %14, %13 : vector<64x128xf32>
    %cst_12 = arith.constant 0.707106769 : f32
    %16 = vector.broadcast %cst_12 : f32 to vector<64x128xf32>
    %17 = arith.mulf %13, %16 : vector<64x128xf32>
    %18 = math.erf %17 : vector<64x128xf32>
    %cst_13 = arith.constant 1.000000e+00 : f32
    %19 = vector.broadcast %cst_13 : f32 to vector<64x128xf32>
    %20 = arith.addf %19, %18 : vector<64x128xf32>
    %21 = arith.mulf %15, %20 : vector<64x128xf32>
    %22 = arith.mulf %8, %21 : vector<64x128xf32>
    %c0_14 = arith.constant 0 : index
    %c0_15 = arith.constant 0 : index
    %23 = vector.load %arg10[%c0_14, %c0_15] : memref<64x128xf32, #tpu.memory_space<vmem>>, vector<64x128xf32>
    %c0_16 = arith.constant 0 : index
    %c0_17 = arith.constant 0 : index
    %24 = vector.load %arg7[%c0_16, %c0_17] : memref<128x128xf32, #tpu.memory_space<vmem>>, vector<128x128xf32>
    %cst_18 = arith.constant dense<0.000000e+00> : vector<64x128xf32>
    %25 = tpu.matmul %22, %24, %cst_18 {dimension_numbers = #tpu.dot_dimension_numbers<[1], [0], [0], [1], [0, 0, 1, 1], [], []>} : vector<64x128xf32>, vector<128x128xf32>, vector<64x128xf32> -> vector<64x128xf32>
    %26 = arith.addf %23, %25 : vector<64x128xf32>
    %c0_19 = arith.constant 0 : index
    %c0_20 = arith.constant 0 : index
    %27 = vector.load %arg10[%c0_19, %c0_20] : memref<64x128xf32, #tpu.memory_space<vmem>>, vector<64x128xf32>
    tpu.vector_store %arg10[%c0_19, %c0_20], %26 {strides = array<i32>} : memref<64x128xf32, #tpu.memory_space<vmem>>, vector<64x128xf32>,
    %c3_i32 = arith.constant 3 : i32
    %28 = arith.cmpi eq, %arg1, %c3_i32 : i32
    %29 = arith.extui %28 : i1 to i32
    %c0_i32_21 = arith.constant 0 : i32
    %30 = arith.cmpi ne, %29, %c0_i32_21 : i32
    scf.if %30 {
      %c0_22 = arith.constant 0 : index
      %c0_23 = arith.constant 0 : index
      %31 = vector.load %arg10[%c0_22, %c0_23] : memref<64x128xf32, #tpu.memory_space<vmem>>, vector<64x128xf32>
      %c0_24 = arith.constant 0 : index
      %c0_25 = arith.constant 0 : index
      %32 = vector.load %arg8[%c0_24, %c0_25] : memref<1x128xf32, #tpu.memory_space<vmem>>, vector<1x128xf32>
      %33 = vector.broadcast %32 : vector<1x128xf32> to vector<64x128xf32>
      %34 = arith.addf %31, %33 : vector<64x128xf32>
      %c0_26 = arith.constant 0 : index
      %c0_27 = arith.constant 0 : index
      %35 = vector.load %arg9[%c0_26, %c0_27] : memref<64x128xf32, #tpu.memory_space<vmem>>, vector<64x128xf32>
      tpu.vector_store %arg9[%c0_26, %c0_27], %34 {strides = array<i32>} : memref<64x128xf32, #tpu.memory_space<vmem>>, vector<64x128xf32>,
    } else {
    }
    return
  }
  func.func @transform_0(%arg0: i32, %arg1: i32) -> (i32, i32) {
    %c0_i32 = arith.constant 0 : i32
    %c0_i32_0 = arith.constant 0 : i32
    return %arg0, %c0_i32 : i32, i32
  }
  func.func @transform_1(%arg0: i32, %arg1: i32) -> (i32, i32) {
    %c0_i32 = arith.constant 0 : i32
    %c0_i32_0 = arith.constant 0 : i32
    return %c0_i32, %arg1 : i32, i32
  }
  func.func @transform_2(%arg0: i32, %arg1: i32) -> (i32, i32) {
    %c0_i32 = arith.constant 0 : i32
    %c0_i32_0 = arith.constant 0 : i32
    return %c0_i32, %arg1 : i32, i32
  }
  func.func @transform_3(%arg0: i32, %arg1: i32) -> (i32, i32) {
    %c0_i32 = arith.constant 0 : i32
    %c0_i32_0 = arith.constant 0 : i32
    return %c0_i32, %arg1 : i32, i32
  }
  func.func @transform_4(%arg0: i32, %arg1: i32) -> (i32, i32) {
    %c0_i32 = arith.constant 0 : i32
    %c0_i32_0 = arith.constant 0 : i32
    return %c0_i32, %arg1 : i32, i32
  }
  func.func @transform_5(%arg0: i32, %arg1: i32) -> (i32, i32) {
    %c0_i32 = arith.constant 0 : i32
    %c0_i32_0 = arith.constant 0 : i32
    return %arg1, %c0_i32 : i32, i32
  }
  func.func @transform_6(%arg0: i32, %arg1: i32) -> (i32, i32) {
    %c0_i32 = arith.constant 0 : i32
    %c0_i32_0 = arith.constant 0 : i32
    %c0_i32_1 = arith.constant 0 : i32
    return %c0_i32, %c0_i32_0 : i32, i32
  }
  func.func @transform_7(%arg0: i32, %arg1: i32) -> (i32, i32) {
    %c0_i32 = arith.constant 0 : i32
    %c0_i32_0 = arith.constant 0 : i32
    return %arg0, %c0_i32 : i32, i32
  }
}

</mosaic_0001>

<llo_original>
// kernel: feed_forward_geglu.1
$region0: #{feed_forward_geglu.1}
  #allocation0 [shape = 'u32[]', space=smem, size = 0x4, offset = 0x4, fixed_abs, tag = 'smem constant byte address 0x4 - core index']
  #allocation1 [shape = 'u32[144,128]{1,0:T(1,128)}', space=vmem, size = 0x12000, scoped, tag = 'internal scratch']
  #allocation2 [shape = 'f32[64,128]{1,0:T(8,128)}', space=vmem, size = 0x8000, scoped, tag = 'scratch operand']
  %s0 = inlined_call_operand.vmem [shape: f32[256,128], index: 0, kind: input, shape index: {}]
  %s1 = inlined_call_operand.vmem [shape: f32[128,512], index: 1, kind: input, shape index: {}]
  %s2 = inlined_call_operand.vmem [shape: f32[128,512], index: 2, kind: input, shape index: {}]
  %s3 = inlined_call_operand.vmem [shape: f32[1,512], index: 3, kind: input, shape index: {}]
  %s4 = inlined_call_operand.vmem [shape: f32[1,512], index: 4, kind: input, shape index: {}]
  %s5 = inlined_call_operand.vmem [shape: f32[512,128], index: 5, kind: input, shape index: {}]
  %s6 = inlined_call_operand.vmem [shape: f32[1,128], index: 6, kind: input, shape index: {}]
  %s7 = inlined_call_operand.vmem [shape: f32[256,128], index: 7, kind: output, shape index: {}]
  %s8 = sld [smem:[#allocation0]]
  $region145: #{feed_forward_geglu.1} parent=0
    _
  %s10 = ssub.s32 1, %s8
  %s11 = scalar_select 0, %s10, %s8
  $region1: #{feed_forward_geglu.1} parent=0
    #allocation3 [shape = 'u8[131072]{0}', space=vmem, size = 0x20000, scoped, tag = 'input window, operand 1']
    #allocation4 [shape = 'u8[131072]{0}', space=vmem, size = 0x20000, scoped, tag = 'input window, operand 2']
    loop: start=0, step=1, limit=18
    $region2: #{feed_forward_geglu.1} parent=1 // loop_pre_header
      _
    $region3: #{feed_forward_geglu.1} parent=1 // loop_header
      %s13 = sphi 0, %s17
      %p14 = scmp.ge.s32.totalorder %s13, 18
      %s20 = sphi 0, %s32
      %s21 = sphi 0, %s28
      %s22 = sphi 0, %s20
      %s23 = sphi 0, %s21
      %s24 = sphi 0, %s22
      %s25 = sphi 0, %s23
      %s35 = sphi 0, %s37
      %s38 = sphi 0, %s35
      %s39 = sphi 0, %s38
      %s55 = sphi 0, %s39
      %s61 = sphi 0, %s63
      %s64 = sphi 0, %s61
      %s65 = sphi 0, %s64
      %s81 = sphi 0, %s65
      %s87 = sphi 0, %s89
      %s90 = sphi 0, %s87
      %s91 = sphi 0, %s90
      %s107 = sphi 0, %s91
      %s113 = sphi 0, %s115
      %s116 = sphi 0, %s113
      %s117 = sphi 0, %s116
      %s133 = sphi 0, %s117
      %s139 = sphi 0, %s141
      %s142 = sphi 0, %s139
      %s143 = sphi 0, %s142
      %s159 = sphi 0, %s143
      %s165 = sphi 0, %s167
      %s168 = sphi 0, %s165
      %s169 = sphi 0, %s168
      %s185 = sphi 0, %s169
      %s189 = sphi 0, %s189
      %s191 = sphi 0, %s189
      %s192 = sphi 0, %s191
      %s206 = sphi 0, %s192
      %s212 = sphi 0, %s214
      %s215 = sphi 0, %s212
      %s216 = sphi 0, %s215
      %s232 = sphi 0, %s216
    $region4: #{feed_forward_geglu.1} parent=1 // loop_header_branch
      %16 = sbr.rel (%p14) target = $region8
    $region5: #{feed_forward_geglu.1} parent=1 // loop_body
      %s18 = ssub.s32 %s13, 1
      %s19 = ssub.s32 %s13, 2
      %s26 = sadd.s32 1, %s21
      %p27 = scmp.ge.s32.totalorder %s26, 4
      %s28 = scalar_select %p27, 0, %s26
      %s29 = sadd.s32 1, %s20
      %s30 = scalar_select %p27, %s29, %s20
      %p31 = scmp.ge.s32.totalorder %s30, 4
      %s32 = scalar_select %p31, 0, %s30
      %s33 = ssub.s32 %s20, %s32
      %p34 = scmp.eq.s32.totalorder %s33, 0
      %s36 = sadd.s32 %s35, 1
      %s37 = scalar_select %p34, %s35, %s36
      %p40 = pneg %p34
      %p41 = scmp.eq.s32.totalorder %s13, 15
      %p42 = por %p40, %p41
      %p43 = scmp.ne.s32.totalorder %s35, %s38
      %p44 = scmp.eq.s32.totalorder %s13, 0
      %p45 = por %p43, %p44
      %p46 = scmp.ne.s32.totalorder %s35, %s38
      %p47 = scmp.eq.s32.totalorder %s18, 15
      %p48 = por %p46, %p47
      %p49 = scmp.ne.s32.totalorder %s38, %s39
      %p50 = scmp.eq.s32.totalorder %s18, 0
      %p51 = por %p49, %p50
      %p52 = scmp.ne.s32.totalorder %s38, %s39
      %p53 = scmp.eq.s32.totalorder %s19, 15
      %p54 = por %p52, %p53
      %p56 = scmp.ne.s32.totalorder %s39, %s55
      %p57 = scmp.eq.s32.totalorder %s19, 0
      %p58 = por %p56, %p57
      %s59 = ssub.s32 %s21, %s28
      %p60 = scmp.eq.s32.totalorder %s59, 0
      %s62 = sadd.s32 %s61, 1
      %s63 = scalar_select %p60, %s61, %s62
      %p66 = pneg %p60
      %p67 = scmp.eq.s32.totalorder %s13, 15
      %p68 = por %p66, %p67
      %p69 = scmp.ne.s32.totalorder %s61, %s64
      %p70 = scmp.eq.s32.totalorder %s13, 0
      %p71 = por %p69, %p70
      %p72 = scmp.ne.s32.totalorder %s61, %s64
      %p73 = scmp.eq.s32.totalorder %s18, 15
      %p74 = por %p72, %p73
      %p75 = scmp.ne.s32.totalorder %s64, %s65
      %p76 = scmp.eq.s32.totalorder %s18, 0
      %p77 = por %p75, %p76
      %p78 = scmp.ne.s32.totalorder %s64, %s65
      %p79 = scmp.eq.s32.totalorder %s19, 15
      %p80 = por %p78, %p79
      %p82 = scmp.ne.s32.totalorder %s65, %s81
      %p83 = scmp.eq.s32.totalorder %s19, 0
      %p84 = por %p82, %p83
      %s85 = ssub.s32 %s21, %s28
      %p86 = scmp.eq.s32.totalorder %s85, 0
      %s88 = sadd.s32 %s87, 1
      %s89 = scalar_select %p86, %s87, %s88
      %p92 = pneg %p86
      %p93 = scmp.eq.s32.totalorder %s13, 15
      %p94 = por %p92, %p93
      %p95 = scmp.ne.s32.totalorder %s87, %s90
      %p96 = scmp.eq.s32.totalorder %s13, 0
      %p97 = por %p95, %p96
      %p98 = scmp.ne.s32.totalorder %s87, %s90
      %p99 = scmp.eq.s32.totalorder %s18, 15
      %p100 = por %p98, %p99
      %p101 = scmp.ne.s32.totalorder %s90, %s91
      %p102 = scmp.eq.s32.totalorder %s18, 0
      %p103 = por %p101, %p102
      %p104 = scmp.ne.s32.totalorder %s90, %s91
      %p105 = scmp.eq.s32.totalorder %s19, 15
      %p106 = por %p104, %p105
      %p108 = scmp.ne.s32.totalorder %s91, %s107
      %p109 = scmp.eq.s32.totalorder %s19, 0
      %p110 = por %p108, %p109
      %s111 = ssub.s32 %s21, %s28
      %p112 = scmp.eq.s32.totalorder %s111, 0
      %s114 = sadd.s32 %s113, 1
      %s115 = scalar_select %p112, %s113, %s114
      %p118 = pneg %p112
      %p119 = scmp.eq.s32.totalorder %s13, 15
      %p120 = por %p118, %p119
      %p121 = scmp.ne.s32.totalorder %s113, %s116
      %p122 = scmp.eq.s32.totalorder %s13, 0
      %p123 = por %p121, %p122
      %p124 = scmp.ne.s32.totalorder %s113, %s116
      %p125 = scmp.eq.s32.totalorder %s18, 15
      %p126 = por %p124, %p125
      %p127 = scmp.ne.s32.totalorder %s116, %s117
      %p128 = scmp.eq.s32.totalorder %s18, 0
      %p129 = por %p127, %p128
      %p130 = scmp.ne.s32.totalorder %s116, %s117
      %p131 = scmp.eq.s32.totalorder %s19, 15
      %p132 = por %p130, %p131
      %p134 = scmp.ne.s32.totalorder %s117, %s133
      %p135 = scmp.eq.s32.totalorder %s19, 0
      %p136 = por %p134, %p135
      %s137 = ssub.s32 %s21, %s28
      %p138 = scmp.eq.s32.totalorder %s137, 0
      %s140 = sadd.s32 %s139, 1
      %s141 = scalar_select %p138, %s139, %s140
      %p144 = pneg %p138
      %p145 = scmp.eq.s32.totalorder %s13, 15
      %p146 = por %p144, %p145
      %p147 = scmp.ne.s32.totalorder %s139, %s142
      %p148 = scmp.eq.s32.totalorder %s13, 0
      %p149 = por %p147, %p148
      %p150 = scmp.ne.s32.totalorder %s139, %s142
      %p151 = scmp.eq.s32.totalorder %s18, 15
      %p152 = por %p150, %p151
      %p153 = scmp.ne.s32.totalorder %s142, %s143
      %p154 = scmp.eq.s32.totalorder %s18, 0
      %p155 = por %p153, %p154
      %p156 = scmp.ne.s32.totalorder %s142, %s143
      %p157 = scmp.eq.s32.totalorder %s19, 15
      %p158 = por %p156, %p157
      %p160 = scmp.ne.s32.totalorder %s143, %s159
      %p161 = scmp.eq.s32.totalorder %s19, 0
      %p162 = por %p160, %p161
      %s163 = ssub.s32 %s21, %s28
      %p164 = scmp.eq.s32.totalorder %s163, 0
      %s166 = sadd.s32 %s165, 1
      %s167 = scalar_select %p164, %s165, %s166
      %p170 = pneg %p164
      %p171 = scmp.eq.s32.totalorder %s13, 15
      %p172 = por %p170, %p171
      %p173 = scmp.ne.s32.totalorder %s165, %s168
      %p174 = scmp.eq.s32.totalorder %s13, 0
      %p175 = por %p173, %p174
      %p176 = scmp.ne.s32.totalorder %s165, %s168
      %p177 = scmp.eq.s32.totalorder %s18, 15
      %p178 = por %p176, %p177
      %p179 = scmp.ne.s32.totalorder %s168, %s169
      %p180 = scmp.eq.s32.totalorder %s18, 0
      %p181 = por %p179, %p180
      %p182 = scmp.ne.s32.totalorder %s168, %s169
      %p183 = scmp.eq.s32.totalorder %s19, 15
      %p184 = por %p182, %p183
      %p186 = scmp.ne.s32.totalorder %s169, %s185
      %p187 = scmp.eq.s32.totalorder %s19, 0
      %p188 = por %p186, %p187
      %s190 = sadd.s32 %s189, 1
      %p193 = scmp.eq.s32.totalorder %s13, 15
      %p194 = scmp.ne.s32.totalorder %s189, %s191
      %p195 = scmp.eq.s32.totalorder %s13, 0
      %p196 = por %p194, %p195
      %p197 = scmp.ne.s32.totalorder %s189, %s191
      %p198 = scmp.eq.s32.totalorder %s18, 15
      %p199 = por %p197, %p198
      %p200 = scmp.ne.s32.totalorder %s191, %s192
      %p201 = scmp.eq.s32.totalorder %s18, 0
      %p202 = por %p200, %p201
      %p203 = scmp.ne.s32.totalorder %s191, %s192
      %p204 = scmp.eq.s32.totalorder %s19, 15
      %p205 = por %p203, %p204
      %p207 = scmp.ne.s32.totalorder %s192, %s206
      %p208 = scmp.eq.s32.totalorder %s19, 0
      %p209 = por %p207, %p208
      %s210 = ssub.s32 %s20, %s32
      %p211 = scmp.eq.s32.totalorder %s210, 0
      %s213 = sadd.s32 %s212, 1
      %s214 = scalar_select %p211, %s212, %s213
      %p217 = pneg %p211
      %p218 = scmp.eq.s32.totalorder %s13, 15
      %p219 = por %p217, %p218
      %p220 = scmp.ne.s32.totalorder %s212, %s215
      %p221 = scmp.eq.s32.totalorder %s13, 0
      %p222 = por %p220, %p221
      %p223 = scmp.ne.s32.totalorder %s212, %s215
      %p224 = scmp.eq.s32.totalorder %s18, 15
      %p225 = por %p223, %p224
      %p226 = scmp.ne.s32.totalorder %s215, %s216
      %p227 = scmp.eq.s32.totalorder %s18, 0
      %p228 = por %p226, %p227
      %p229 = scmp.ne.s32.totalorder %s215, %s216
      %p230 = scmp.eq.s32.totalorder %s19, 15
      %p231 = por %p229, %p230
      %p233 = scmp.ne.s32.totalorder %s216, %s232
      %p234 = scmp.eq.s32.totalorder %s19, 0
      %p235 = por %p233, %p234
      %p236 = scmp.le.s32.totalorder 1, %s13
      %p237 = scmp.lt.s32.totalorder %s13, 17
      %p238 = pnand %p236, %p237
      %p239 = pneg %p238
      // Predicated region
      $region9: #{feed_forward_geglu.1} parent=5 // pred_check
        _
      $region10: #{feed_forward_geglu.1} parent=5 // pred_check_branch
        %241 = sbr.rel (%p238) target = $region12
      $region11: #{feed_forward_geglu.1} parent=5 // pred_region
        %s242 = ssub.s32 %s13, 1
        // Predicated region
        $region13: #{feed_forward_geglu.1} parent=11 // pred_check
          %p243 = pneg %p202
        $region14: #{feed_forward_geglu.1} parent=11 // pred_check_branch
          %245 = sbr.rel (%p243) target = $region16
        $region15: #{feed_forward_geglu.1} parent=11 // pred_region
          _
        $region16: #{feed_forward_geglu.1} parent=11 // pred_fallthru
          _
      $region12: #{feed_forward_geglu.1} parent=5 // pred_fallthru
        _
      %p246 = scmp.lt.s32.totalorder %s13, 16
      // Predicated region
      $region17: #{feed_forward_geglu.1} parent=5 // pred_check
        %p247 = pneg %p246
      $region18: #{feed_forward_geglu.1} parent=5 // pred_check_branch
        %249 = sbr.rel (%p247) target = $region20
      $region19: #{feed_forward_geglu.1} parent=5 // pred_region
        // Predicated region
        $region21: #{feed_forward_geglu.1} parent=19 // pred_check
          %p250 = pneg %p45
        $region22: #{feed_forward_geglu.1} parent=19 // pred_check_branch
          %252 = sbr.rel (%p250) target = $region24
        $region23: #{feed_forward_geglu.1} parent=19 // pred_region
          %s253 = smul.u32 8, %s20
          %p254 = scmp.lt.s32.totalorder %s253, 31
          %s255 = scalar_select %p254, %s253, 31
          %s256 = smul.addr %s255, 8
          %s257 = scalar_lea.vmem %s0, %s256
          %s258 = smul.u32 8, %s20
        $region24: #{feed_forward_geglu.1} parent=19 // pred_fallthru
          _
        // Predicated region
        $region25: #{feed_forward_geglu.1} parent=19 // pred_check
          %p259 = pneg %p71
        $region26: #{feed_forward_geglu.1} parent=19 // pred_check_branch
          %261 = sbr.rel (%p259) target = $region28
        $region27: #{feed_forward_geglu.1} parent=19 // pred_region
          %s262 = sand.u32 %s61, 1
          %s263 = sand.u32 %s61, 1
          %s264 = smul.addr %s263, 128
          %s265 = scalar_lea.vmem [#allocation3], %s264
          %s266 = smul.addr %s21, 8
          %s267 = scalar_lea.vmem %s1, %s266
          // Predicated region
          $region29: #{feed_forward_geglu.1} parent=27 // pred_check
            _
          $region30: #{feed_forward_geglu.1} parent=27 // pred_check_branch
            %269 = sbr.rel (0) target = $region32
          $region31: #{feed_forward_geglu.1} parent=27 // pred_region
            // Predicated region
            $region33: #{feed_forward_geglu.1} parent=31 // pred_check
              _
            $region34: #{feed_forward_geglu.1} parent=31 // pred_check_branch
              %271 = sbr.rel (0) target = $region36
            $region35: #{feed_forward_geglu.1} parent=31 // pred_region
              // Predicated region
              $region48: #{feed_forward_geglu.1} parent=35 // pred_check
                _
              $region49: #{feed_forward_geglu.1} parent=35 // pred_check_branch
                %316 = sbr.rel (0) target = $region51
              $region50: #{feed_forward_geglu.1} parent=35 // pred_region
                loop: start=0, step=1, limit=1
                $region52: #{feed_forward_geglu.1} parent=50 // loop_pre_header
                  _
                $region53: #{feed_forward_geglu.1} parent=50 // loop_header
                  %s318 = sphi 0, %s322
                  %p319 = scmp.ge.s32.totalorder %s318, 1
                  %s323 = sphi %s267, %s267
                  %s324 = sphi %s265, %s265
                $region54: #{feed_forward_geglu.1} parent=50 // loop_header_branch
                  %321 = sbr.rel (%p319) target = $region58
                $region55: #{feed_forward_geglu.1} parent=50 // loop_body
                  %v325 = vld [vmem:[%s323] sm:$0xff]
                  %326 = vst [vmem:[%s324] sm:$0xff] %v325
                  %v327 = vld [vmem:[%s323 + $0x20] sm:$0xff]
                  %328 = vst [vmem:[%s324 + $0x8] sm:$0xff] %v327
                  %v329 = vld [vmem:[%s323 + $0x40] sm:$0xff]
                  %330 = vst [vmem:[%s324 + $0x10] sm:$0xff] %v329
                  %v331 = vld [vmem:[%s323 + $0x60] sm:$0xff]
                  %332 = vst [vmem:[%s324 + $0x18] sm:$0xff] %v331
                  %v333 = vld [vmem:[%s323 + $0x80] sm:$0xff]
                  %334 = vst [vmem:[%s324 + $0x20] sm:$0xff] %v333
                  %v335 = vld [vmem:[%s323 + $0xa0] sm:$0xff]
                  %336 = vst [vmem:[%s324 + $0x28] sm:$0xff] %v335
                  %v337 = vld [vmem:[%s323 + $0xc0] sm:$0xff]
                  %338 = vst [vmem:[%s324 + $0x30] sm:$0xff] %v337
                  %v339 = vld [vmem:[%s323 + $0xe0] sm:$0xff]
                  %340 = vst [vmem:[%s324 + $0x38] sm:$0xff] %v339
                  %v341 = vld [vmem:[%s323 + $0x100] sm:$0xff]
                  %342 = vst [vmem:[%s324 + $0x40] sm:$0xff] %v341
                  %v343 = vld [vmem:[%s323 + $0x120] sm:$0xff]
                  %344 = vst [vmem:[%s324 + $0x48] sm:$0xff] %v343
                  %v345 = vld [vmem:[%s323 + $0x140] sm:$0xff]
                  %346 = vst [vmem:[%s324 + $0x50] sm:$0xff] %v345
                  %v347 = vld [vmem:[%s323 + $0x160] sm:$0xff]
                  %348 = vst [vmem:[%s324 + $0x58] sm:$0xff] %v347
                  %v349 = vld [vmem:[%s323 + $0x180] sm:$0xff]
                  %350 = vst [vmem:[%s324 + $0x60] sm:$0xff] %v349
                  %v351 = vld [vmem:[%s323 + $0x1a0] sm:$0xff]
                  %352 = vst [vmem:[%s324 + $0x68] sm:$0xff] %v351
                  %v353 = vld [vmem:[%s323 + $0x1c0] sm:$0xff]
                  %354 = vst [vmem:[%s324 + $0x70] sm:$0xff] %v353
                  %v355 = vld [vmem:[%s323 + $0x1e0] sm:$0xff]
                  %356 = vst [vmem:[%s324 + $0x78] sm:$0xff] %v355
                $region56: #{feed_forward_geglu.1} parent=50 // loop_footer
                  %s322 = sadd.s32 1, %s318
                $region57: #{feed_forward_geglu.1} parent=50 // loop_footer_branch
                  %317 = sbr.rel target = $region53
                $region58: #{feed_forward_geglu.1} parent=50 // loop_exit
                  _
              $region51: #{feed_forward_geglu.1} parent=35 // pred_fallthru
                _
              // Predicated region
              $region59: #{feed_forward_geglu.1} parent=35 // pred_check
                _
              $region60: #{feed_forward_geglu.1} parent=35 // pred_check_branch
                %358 = sbr.rel target = $region62
              $region61: #{feed_forward_geglu.1} parent=35 // pred_region
                _
              $region62: #{feed_forward_geglu.1} parent=35 // pred_fallthru
                _
            $region36: #{feed_forward_geglu.1} parent=31 // pred_fallthru
              _
            // Predicated region
            $region37: #{feed_forward_geglu.1} parent=31 // pred_check
              _
            $region38: #{feed_forward_geglu.1} parent=31 // pred_check_branch
              %273 = sbr.rel target = $region40
            $region39: #{feed_forward_geglu.1} parent=31 // pred_region
              loop: start=0, step=1, limit=1
              $region41: #{feed_forward_geglu.1} parent=39 // loop_pre_header
                _
              $region42: #{feed_forward_geglu.1} parent=39 // loop_header
                %s276 = sphi 0, %s280
                %p277 = scmp.ge.s32.totalorder %s276, 1
                %s281 = sphi %s267, %s267
                %s282 = sphi %s265, %s265
              $region43: #{feed_forward_geglu.1} parent=39 // loop_header_branch
                %279 = sbr.rel (%p277) target = $region47
              $region44: #{feed_forward_geglu.1} parent=39 // loop_body
                %v283 = vld [vmem:[%s281] sm:$0xff]
                %284 = vst [vmem:[%s282] sm:$0xff] %v283
                %v285 = vld [vmem:[%s281 + $0x20] sm:$0xff]
                %286 = vst [vmem:[%s282 + $0x8] sm:$0xff] %v285
                %v287 = vld [vmem:[%s281 + $0x40] sm:$0xff]
                %288 = vst [vmem:[%s282 + $0x10] sm:$0xff] %v287
                %v289 = vld [vmem:[%s281 + $0x60] sm:$0xff]
                %290 = vst [vmem:[%s282 + $0x18] sm:$0xff] %v289
                %v291 = vld [vmem:[%s281 + $0x80] sm:$0xff]
                %292 = vst [vmem:[%s282 + $0x20] sm:$0xff] %v291
                %v293 = vld [vmem:[%s281 + $0xa0] sm:$0xff]
                %294 = vst [vmem:[%s282 + $0x28] sm:$0xff] %v293
                %v295 = vld [vmem:[%s281 + $0xc0] sm:$0xff]
                %296 = vst [vmem:[%s282 + $0x30] sm:$0xff] %v295
                %v297 = vld [vmem:[%s281 + $0xe0] sm:$0xff]
                %298 = vst [vmem:[%s282 + $0x38] sm:$0xff] %v297
                %v299 = vld [vmem:[%s281 + $0x100] sm:$0xff]
                %300 = vst [vmem:[%s282 + $0x40] sm:$0xff] %v299
                %v301 = vld [vmem:[%s281 + $0x120] sm:$0xff]
                %302 = vst [vmem:[%s282 + $0x48] sm:$0xff] %v301
                %v303 = vld [vmem:[%s281 + $0x140] sm:$0xff]
                %304 = vst [vmem:[%s282 + $0x50] sm:$0xff] %v303
                %v305 = vld [vmem:[%s281 + $0x160] sm:$0xff]
                %306 = vst [vmem:[%s282 + $0x58] sm:$0xff] %v305
                %v307 = vld [vmem:[%s281 + $0x180] sm:$0xff]
                %308 = vst [vmem:[%s282 + $0x60] sm:$0xff] %v307
                %v309 = vld [vmem:[%s281 + $0x1a0] sm:$0xff]
                %310 = vst [vmem:[%s282 + $0x68] sm:$0xff] %v309
                %v311 = vld [vmem:[%s281 + $0x1c0] sm:$0xff]
                %312 = vst [vmem:[%s282 + $0x70] sm:$0xff] %v311
                %v313 = vld [vmem:[%s281 + $0x1e0] sm:$0xff]
                %314 = vst [vmem:[%s282 + $0x78] sm:$0xff] %v313
              $region45: #{feed_forward_geglu.1} parent=39 // loop_footer
                %s280 = sadd.s32 1, %s276
              $region46: #{feed_forward_geglu.1} parent=39 // loop_footer_branch
                %275 = sbr.rel target = $region42
              $region47: #{feed_forward_geglu.1} parent=39 // loop_exit
                _
            $region40: #{feed_forward_geglu.1} parent=31 // pred_fallthru
              _
          $region32: #{feed_forward_geglu.1} parent=27 // pred_fallthru
            _
          %359 = vnop
        $region28: #{feed_forward_geglu.1} parent=19 // pred_fallthru
          _
        // Predicated region
        $region63: #{feed_forward_geglu.1} parent=19 // pred_check
          %p360 = pneg %p97
        $region64: #{feed_forward_geglu.1} parent=19 // pred_check_branch
          %362 = sbr.rel (%p360) target = $region66
        $region65: #{feed_forward_geglu.1} parent=19 // pred_region
          %s363 = sand.u32 %s87, 1
          %s364 = sand.u32 %s87, 1
          %s365 = smul.addr %s364, 128
          %s366 = scalar_lea.vmem [#allocation4], %s365
          %s367 = smul.addr %s21, 8
          %s368 = scalar_lea.vmem %s2, %s367
          // Predicated region
          $region67: #{feed_forward_geglu.1} parent=65 // pred_check
            _
          $region68: #{feed_forward_geglu.1} parent=65 // pred_check_branch
            %370 = sbr.rel (0) target = $region70
          $region69: #{feed_forward_geglu.1} parent=65 // pred_region
            // Predicated region
            $region71: #{feed_forward_geglu.1} parent=69 // pred_check
              _
            $region72: #{feed_forward_geglu.1} parent=69 // pred_check_branch
              %372 = sbr.rel (0) target = $region74
            $region73: #{feed_forward_geglu.1} parent=69 // pred_region
              // Predicated region
              $region86: #{feed_forward_geglu.1} parent=73 // pred_check
                _
              $region87: #{feed_forward_geglu.1} parent=73 // pred_check_branch
                %417 = sbr.rel (0) target = $region89
              $region88: #{feed_forward_geglu.1} parent=73 // pred_region
                loop: start=0, step=1, limit=1
                $region90: #{feed_forward_geglu.1} parent=88 // loop_pre_header
                  _
                $region91: #{feed_forward_geglu.1} parent=88 // loop_header
                  %s419 = sphi 0, %s423
                  %p420 = scmp.ge.s32.totalorder %s419, 1
                  %s424 = sphi %s368, %s368
                  %s425 = sphi %s366, %s366
                $region92: #{feed_forward_geglu.1} parent=88 // loop_header_branch
                  %422 = sbr.rel (%p420) target = $region96
                $region93: #{feed_forward_geglu.1} parent=88 // loop_body
                  %v426 = vld [vmem:[%s424] sm:$0xff]
                  %427 = vst [vmem:[%s425] sm:$0xff] %v426
                  %v428 = vld [vmem:[%s424 + $0x20] sm:$0xff]
                  %429 = vst [vmem:[%s425 + $0x8] sm:$0xff] %v428
                  %v430 = vld [vmem:[%s424 + $0x40] sm:$0xff]
                  %431 = vst [vmem:[%s425 + $0x10] sm:$0xff] %v430
                  %v432 = vld [vmem:[%s424 + $0x60] sm:$0xff]
                  %433 = vst [vmem:[%s425 + $0x18] sm:$0xff] %v432
                  %v434 = vld [vmem:[%s424 + $0x80] sm:$0xff]
                  %435 = vst [vmem:[%s425 + $0x20] sm:$0xff] %v434
                  %v436 = vld [vmem:[%s424 + $0xa0] sm:$0xff]
                  %437 = vst [vmem:[%s425 + $0x28] sm:$0xff] %v436
                  %v438 = vld [vmem:[%s424 + $0xc0] sm:$0xff]
                  %439 = vst [vmem:[%s425 + $0x30] sm:$0xff] %v438
                  %v440 = vld [vmem:[%s424 + $0xe0] sm:$0xff]
                  %441 = vst [vmem:[%s425 + $0x38] sm:$0xff] %v440
                  %v442 = vld [vmem:[%s424 + $0x100] sm:$0xff]
                  %443 = vst [vmem:[%s425 + $0x40] sm:$0xff] %v442
                  %v444 = vld [vmem:[%s424 + $0x120] sm:$0xff]
                  %445 = vst [vmem:[%s425 + $0x48] sm:$0xff] %v444
                  %v446 = vld [vmem:[%s424 + $0x140] sm:$0xff]
                  %447 = vst [vmem:[%s425 + $0x50] sm:$0xff] %v446
                  %v448 = vld [vmem:[%s424 + $0x160] sm:$0xff]
                  %449 = vst [vmem:[%s425 + $0x58] sm:$0xff] %v448
                  %v450 = vld [vmem:[%s424 + $0x180] sm:$0xff]
                  %451 = vst [vmem:[%s425 + $0x60] sm:$0xff] %v450
                  %v452 = vld [vmem:[%s424 + $0x1a0] sm:$0xff]
                  %453 = vst [vmem:[%s425 + $0x68] sm:$0xff] %v452
                  %v454 = vld [vmem:[%s424 + $0x1c0] sm:$0xff]
                  %455 = vst [vmem:[%s425 + $0x70] sm:$0xff] %v454
                  %v456 = vld [vmem:[%s424 + $0x1e0] sm:$0xff]
                  %457 = vst [vmem:[%s425 + $0x78] sm:$0xff] %v456
                $region94: #{feed_forward_geglu.1} parent=88 // loop_footer
                  %s423 = sadd.s32 1, %s419
                $region95: #{feed_forward_geglu.1} parent=88 // loop_footer_branch
                  %418 = sbr.rel target = $region91
                $region96: #{feed_forward_geglu.1} parent=88 // loop_exit
                  _
              $region89: #{feed_forward_geglu.1} parent=73 // pred_fallthru
                _
              // Predicated region
              $region97: #{feed_forward_geglu.1} parent=73 // pred_check
                _
              $region98: #{feed_forward_geglu.1} parent=73 // pred_check_branch
                %459 = sbr.rel target = $region100
              $region99: #{feed_forward_geglu.1} parent=73 // pred_region
                _
              $region100: #{feed_forward_geglu.1} parent=73 // pred_fallthru
                _
            $region74: #{feed_forward_geglu.1} parent=69 // pred_fallthru
              _
            // Predicated region
            $region75: #{feed_forward_geglu.1} parent=69 // pred_check
              _
            $region76: #{feed_forward_geglu.1} parent=69 // pred_check_branch
              %374 = sbr.rel target = $region78
            $region77: #{feed_forward_geglu.1} parent=69 // pred_region
              loop: start=0, step=1, limit=1
              $region79: #{feed_forward_geglu.1} parent=77 // loop_pre_header
                _
              $region80: #{feed_forward_geglu.1} parent=77 // loop_header
                %s377 = sphi 0, %s381
                %p378 = scmp.ge.s32.totalorder %s377, 1
                %s382 = sphi %s368, %s368
                %s383 = sphi %s366, %s366
              $region81: #{feed_forward_geglu.1} parent=77 // loop_header_branch
                %380 = sbr.rel (%p378) target = $region85
              $region82: #{feed_forward_geglu.1} parent=77 // loop_body
                %v384 = vld [vmem:[%s382] sm:$0xff]
                %385 = vst [vmem:[%s383] sm:$0xff] %v384
                %v386 = vld [vmem:[%s382 + $0x20] sm:$0xff]
                %387 = vst [vmem:[%s383 + $0x8] sm:$0xff] %v386
                %v388 = vld [vmem:[%s382 + $0x40] sm:$0xff]
                %389 = vst [vmem:[%s383 + $0x10] sm:$0xff] %v388
                %v390 = vld [vmem:[%s382 + $0x60] sm:$0xff]
                %391 = vst [vmem:[%s383 + $0x18] sm:$0xff] %v390
                %v392 = vld [vmem:[%s382 + $0x80] sm:$0xff]
                %393 = vst [vmem:[%s383 + $0x20] sm:$0xff] %v392
                %v394 = vld [vmem:[%s382 + $0xa0] sm:$0xff]
                %395 = vst [vmem:[%s383 + $0x28] sm:$0xff] %v394
                %v396 = vld [vmem:[%s382 + $0xc0] sm:$0xff]
                %397 = vst [vmem:[%s383 + $0x30] sm:$0xff] %v396
                %v398 = vld [vmem:[%s382 + $0xe0] sm:$0xff]
                %399 = vst [vmem:[%s383 + $0x38] sm:$0xff] %v398
                %v400 = vld [vmem:[%s382 + $0x100] sm:$0xff]
                %401 = vst [vmem:[%s383 + $0x40] sm:$0xff] %v400
                %v402 = vld [vmem:[%s382 + $0x120] sm:$0xff]
                %403 = vst [vmem:[%s383 + $0x48] sm:$0xff] %v402
                %v404 = vld [vmem:[%s382 + $0x140] sm:$0xff]
                %405 = vst [vmem:[%s383 + $0x50] sm:$0xff] %v404
                %v406 = vld [vmem:[%s382 + $0x160] sm:$0xff]
                %407 = vst [vmem:[%s383 + $0x58] sm:$0xff] %v406
                %v408 = vld [vmem:[%s382 + $0x180] sm:$0xff]
                %409 = vst [vmem:[%s383 + $0x60] sm:$0xff] %v408
                %v410 = vld [vmem:[%s382 + $0x1a0] sm:$0xff]
                %411 = vst [vmem:[%s383 + $0x68] sm:$0xff] %v410
                %v412 = vld [vmem:[%s382 + $0x1c0] sm:$0xff]
                %413 = vst [vmem:[%s383 + $0x70] sm:$0xff] %v412
                %v414 = vld [vmem:[%s382 + $0x1e0] sm:$0xff]
                %415 = vst [vmem:[%s383 + $0x78] sm:$0xff] %v414
              $region83: #{feed_forward_geglu.1} parent=77 // loop_footer
                %s381 = sadd.s32 1, %s377
              $region84: #{feed_forward_geglu.1} parent=77 // loop_footer_branch
                %376 = sbr.rel target = $region80
              $region85: #{feed_forward_geglu.1} parent=77 // loop_exit
                _
            $region78: #{feed_forward_geglu.1} parent=69 // pred_fallthru
              _
          $region70: #{feed_forward_geglu.1} parent=65 // pred_fallthru
            _
          %460 = vnop
        $region66: #{feed_forward_geglu.1} parent=19 // pred_fallthru
          _
        // Predicated region
        $region101: #{feed_forward_geglu.1} parent=19 // pred_check
          %p461 = pneg %p123
        $region102: #{feed_forward_geglu.1} parent=19 // pred_check_branch
          %463 = sbr.rel (%p461) target = $region104
        $region103: #{feed_forward_geglu.1} parent=19 // pred_region
          %p464 = scmp.lt.s32.totalorder %s21, 3
          %s465 = scalar_select %p464, %s21, 3
          %s466 = scalar_lea.vmem %s3, %s465
        $region104: #{feed_forward_geglu.1} parent=19 // pred_fallthru
          _
        // Predicated region
        $region105: #{feed_forward_geglu.1} parent=19 // pred_check
          %p467 = pneg %p149
        $region106: #{feed_forward_geglu.1} parent=19 // pred_check_branch
          %469 = sbr.rel (%p467) target = $region108
        $region107: #{feed_forward_geglu.1} parent=19 // pred_region
          %p470 = scmp.lt.s32.totalorder %s21, 3
          %s471 = scalar_select %p470, %s21, 3
          %s472 = scalar_lea.vmem %s4, %s471
        $region108: #{feed_forward_geglu.1} parent=19 // pred_fallthru
          _
        // Predicated region
        $region109: #{feed_forward_geglu.1} parent=19 // pred_check
          %p473 = pneg %p175
        $region110: #{feed_forward_geglu.1} parent=19 // pred_check_branch
          %475 = sbr.rel (%p473) target = $region112
        $region111: #{feed_forward_geglu.1} parent=19 // pred_region
          %s476 = smul.u32 16, %s21
          %p477 = scmp.lt.s32.totalorder %s476, 63
          %s478 = scalar_select %p477, %s476, 63
          %s479 = smul.addr %s478, 8
          %s480 = scalar_lea.vmem %s5, %s479
          %s481 = smul.u32 16, %s21
        $region112: #{feed_forward_geglu.1} parent=19 // pred_fallthru
          _
      $region20: #{feed_forward_geglu.1} parent=5 // pred_fallthru
        _
      %p482 = scmp.le.s32.totalorder 1, %s13
      %p483 = scmp.lt.s32.totalorder %s13, 17
      %p484 = pnand %p482, %p483
      %p485 = pneg %p484
      // Predicated region
      $region113: #{feed_forward_geglu.1} parent=5 // pred_check
        _
      $region114: #{feed_forward_geglu.1} parent=5 // pred_check_branch
        %487 = sbr.rel (%p484) target = $region116
      $region115: #{feed_forward_geglu.1} parent=5 // pred_region
        %s488 = ssub.s32 %s13, 1
        %s489 = sand.u32 %s64, 1
        %s490 = sand.u32 %s64, 1
        %s491 = smul.addr %s490, 128
        %s492 = scalar_lea.vmem [#allocation3], %s491
        // Predicated region
        $region117: #{feed_forward_geglu.1} parent=115 // pred_check
          %p493 = pneg %p77
        $region118: #{feed_forward_geglu.1} parent=115 // pred_check_branch
          %495 = sbr.rel (%p493) target = $region120
        $region119: #{feed_forward_geglu.1} parent=115 // pred_region
          _
        $region120: #{feed_forward_geglu.1} parent=115 // pred_fallthru
          _
        %s496 = sand.u32 %s90, 1
        %s497 = sand.u32 %s90, 1
        %s498 = smul.addr %s497, 128
        %s499 = scalar_lea.vmem [#allocation4], %s498
        // Predicated region
        $region121: #{feed_forward_geglu.1} parent=115 // pred_check
          %p500 = pneg %p103
        $region122: #{feed_forward_geglu.1} parent=115 // pred_check_branch
          %502 = sbr.rel (%p500) target = $region124
        $region123: #{feed_forward_geglu.1} parent=115 // pred_region
          _
        $region124: #{feed_forward_geglu.1} parent=115 // pred_fallthru
          _
        %s503 = smul.u32 8, %s22
        %p504 = scmp.lt.s32.totalorder %s503, 31
        %s505 = scalar_select %p504, %s503, 31
        %s506 = smul.addr %s505, 8
        %s507 = scalar_lea.vmem %s0, %s506
        %p508 = pneg %p51
        %p509 = pneg %p48
        %s510 = sand.u32 %s64, 1
        %s511 = sand.u32 %s64, 1
        %s512 = smul.addr %s511, 128
        %s513 = scalar_lea.vmem [#allocation3], %s512
        %p514 = pneg %p77
        %p515 = pneg %p74
        %s516 = sand.u32 %s90, 1
        %s517 = sand.u32 %s90, 1
        %s518 = smul.addr %s517, 128
        %s519 = scalar_lea.vmem [#allocation4], %s518
        %p520 = pneg %p103
        %p521 = pneg %p100
        %p522 = scmp.lt.s32.totalorder %s23, 3
        %s523 = scalar_select %p522, %s23, 3
        %s524 = scalar_lea.vmem %s3, %s523
        %p525 = pneg %p129
        %p526 = pneg %p126
        %p527 = scmp.lt.s32.totalorder %s23, 3
        %s528 = scalar_select %p527, %s23, 3
        %s529 = scalar_lea.vmem %s4, %s528
        %p530 = pneg %p155
        %p531 = pneg %p152
        %s532 = smul.u32 16, %s23
        %p533 = scmp.lt.s32.totalorder %s532, 63
        %s534 = scalar_select %p533, %s532, 63
        %s535 = smul.addr %s534, 8
        %s536 = scalar_lea.vmem %s5, %s535
        %p537 = pneg %p181
        %p538 = pneg %p178
        %p539 = pneg %p202
        %p540 = pneg %p199
        %p541 = pneg %p228
        %p542 = pneg %p225
        %s543 = smul.u32 8, %s22
        %p544 = scmp.lt.s32.totalorder %s543, 31
        %s545 = scalar_select %p544, %s543, 31
        %s546 = smul.addr %s545, 8
        %s547 = scalar_lea.vmem %s7, %s546
        %s548 = smul.u32 8, %s22
        %p549 = scmp.lt.s32.totalorder %s548, 31
        %s550 = scalar_select %p549, %s548, 31
        %s551 = smul.addr %s550, 8
        %s552 = scalar_lea.vmem %s0, %s551
        %s553 = smul.u32 8, %s22
        %p554 = scmp.lt.s32.totalorder %s23, 3
        %s555 = scalar_select %p554, %s23, 3
        %s556 = scalar_lea.vmem %s3, %s555
        %p557 = scmp.lt.s32.totalorder %s23, 3
        %s558 = scalar_select %p557, %s23, 3
        %s559 = scalar_lea.vmem %s4, %s558
        %s560 = smul.u32 16, %s23
        %p561 = scmp.lt.s32.totalorder %s560, 63
        %s562 = scalar_select %p561, %s560, 63
        %s563 = smul.addr %s562, 8
        %s564 = scalar_lea.vmem %s5, %s563
        %s565 = smul.u32 16, %s23
        %s566 = smul.u32 8, %s22
        %p567 = scmp.lt.s32.totalorder %s566, 31
        %s568 = scalar_select %p567, %s566, 31
        %s569 = smul.addr %s568, 8
        %s570 = scalar_lea.vmem %s7, %s569
        %s571 = smul.u32 8, %s22
        %p572 = scmp.eq.s32.totalorder %s23, 0
        // Predicated region
        $region125: #{feed_forward_geglu.1} parent=115 // pred_check
          %p573 = pneg %p572
        $region126: #{feed_forward_geglu.1} parent=115 // pred_check_branch
          %575 = sbr.rel (%p573) target = $region128
        $region127: #{feed_forward_geglu.1} parent=115 // pred_region
          %576 = vst [vmem:[#allocation2] sm:$0xff] 0.0
          %577 = vst [vmem:[#allocation2 + $0x8] sm:$0xff] 0.0
          %578 = vst [vmem:[#allocation2 + $0x10] sm:$0xff] 0.0
          %579 = vst [vmem:[#allocation2 + $0x18] sm:$0xff] 0.0
          %580 = vst [vmem:[#allocation2 + $0x20] sm:$0xff] 0.0
          %581 = vst [vmem:[#allocation2 + $0x28] sm:$0xff] 0.0
          %582 = vst [vmem:[#allocation2 + $0x30] sm:$0xff] 0.0
          %583 = vst [vmem:[#allocation2 + $0x38] sm:$0xff] 0.0
        $region128: #{feed_forward_geglu.1} parent=115 // pred_fallthru
          _
        %v584 = vld [vmem:[%s552] sm:$0xff]
        %v585 = vld [vmem:[%s552 + $0x8] sm:$0xff]
        %v586 = vld [vmem:[%s552 + $0x10] sm:$0xff]
        %v587 = vld [vmem:[%s552 + $0x18] sm:$0xff]
        %v588 = vld [vmem:[%s552 + $0x20] sm:$0xff]
        %v589 = vld [vmem:[%s552 + $0x28] sm:$0xff]
        %v590 = vld [vmem:[%s552 + $0x30] sm:$0xff]
        %v591 = vld [vmem:[%s552 + $0x38] sm:$0xff]
        %v592 = vld [vmem:[%s492] sm:$0xff]
        %v593 = vld [vmem:[%s492 + $0x8] sm:$0xff]
        %v594 = vld [vmem:[%s492 + $0x10] sm:$0xff]
        %v595 = vld [vmem:[%s492 + $0x18] sm:$0xff]
        %v596 = vld [vmem:[%s492 + $0x20] sm:$0xff]
        %v597 = vld [vmem:[%s492 + $0x28] sm:$0xff]
        %v598 = vld [vmem:[%s492 + $0x30] sm:$0xff]
        %v599 = vld [vmem:[%s492 + $0x38] sm:$0xff]
        %v600 = vld [vmem:[%s492 + $0x40] sm:$0xff]
        %v601 = vld [vmem:[%s492 + $0x48] sm:$0xff]
        %v602 = vld [vmem:[%s492 + $0x50] sm:$0xff]
        %v603 = vld [vmem:[%s492 + $0x58] sm:$0xff]
        %v604 = vld [vmem:[%s492 + $0x60] sm:$0xff]
        %v605 = vld [vmem:[%s492 + $0x68] sm:$0xff]
        %v606 = vld [vmem:[%s492 + $0x70] sm:$0xff]
        %v607 = vld [vmem:[%s492 + $0x78] sm:$0xff]
        %v608 = vld [vmem:[%s556] sm:$0x1]
        %v610 = vlaneseq
        %v611 = vshrl.u32 %v610, 7
        %v612 = vsub.s32 0, %v611
        %v613 = vrot.slane %v608, %v612
        %615 = vmatprep.subr.mxu0 0.0
        %616 = vmatpush1.msra.mxu0 %v592
        %617 = vmatprep.subr.mxu0 0.0
        %618 = vmatpush1.msra.mxu0 %v593
        %619 = vmatprep.subr.mxu0 0.0
        %620 = vmatpush1.msra.mxu0 %v594
        %621 = vmatprep.subr.mxu0 0.0
        %622 = vmatpush1.msra.mxu0 %v595
        %623 = vmatprep.subr.mxu0 0.0
        %624 = vmatpush1.msra.mxu0 %v596
        %625 = vmatprep.subr.mxu0 0.0
        %626 = vmatpush1.msra.mxu0 %v597
        %627 = vmatprep.subr.mxu0 0.0
        %628 = vmatpush1.msra.mxu0 %v598
        %629 = vmatprep.subr.mxu0 0.0
        %630 = vmatpush1.msra.mxu0 %v599
        %631 = vmatprep.subr.mxu0 0.0
        %632 = vmatpush1.msra.mxu0 %v600
        %633 = vmatprep.subr.mxu0 0.0
        %634 = vmatpush1.msra.mxu0 %v601
        %635 = vmatprep.subr.mxu0 0.0
        %636 = vmatpush1.msra.mxu0 %v602
        %637 = vmatprep.subr.mxu0 0.0
        %638 = vmatpush1.msra.mxu0 %v603
        %639 = vmatprep.subr.mxu0 0.0
        %640 = vmatpush1.msra.mxu0 %v604
        %641 = vmatprep.subr.mxu0 0.0
        %642 = vmatpush1.msra.mxu0 %v605
        %643 = vmatprep.subr.mxu0 0.0
        %644 = vmatpush1.msra.mxu0 %v606
        %645 = vmatprep.subr.mxu0 0.0
        %646 = vmatpush1.msra.mxu0 %v607
        %647 = vmatprep.subr.mxu0 0.0
        %648 = vmatpush1.msra.mxu0 0.0
        %649 = vmatprep.subr.mxu0 0.0
        %650 = vmatpush1.msra.mxu0 0.0
        %651 = vmatprep.subr.mxu0 0.0
        %652 = vmatpush1.msra.mxu0 0.0
        %653 = vmatprep.subr.mxu0 0.0
        %654 = vmatpush1.msra.mxu0 0.0
        %655 = vmatprep.subr.mxu0 0.0
        %656 = vmatpush1.msra.mxu0 0.0
        %657 = vmatprep.subr.mxu0 0.0
        %658 = vmatpush1.msra.mxu0 0.0
        %659 = vmatprep.subr.mxu0 0.0
        %660 = vmatpush1.msra.mxu0 0.0
        %661 = vmatprep.subr.mxu0 0.0
        %662 = vmatpush1.msra.mxu0 0.0
        %663 = vmatprep.subr.mxu0 0.0
        %664 = vmatpush1.msra.mxu0 0.0
        %665 = vmatprep.subr.mxu0 0.0
        %666 = vmatpush1.msra.mxu0 0.0
        %667 = vmatprep.subr.mxu0 0.0
        %668 = vmatpush1.msra.mxu0 0.0
        %669 = vmatprep.subr.mxu0 0.0
        %670 = vmatpush1.msra.mxu0 0.0
        %671 = vmatprep.subr.mxu0 0.0
        %672 = vmatpush1.msra.mxu0 0.0
        %673 = vmatprep.subr.mxu0 0.0
        %674 = vmatpush1.msra.mxu0 0.0
        %675 = vmatprep.subr.mxu0 0.0
        %676 = vmatpush1.msra.mxu0 0.0
        %677 = vmatprep.subr.mxu0 0.0
        %678 = vmatpush1.msra.mxu0 0.0
        %679 = vmatprep.mubr.f32.mxu0 0.0
        %680 = vmatmul.mubr.f32.gmra.mrb[0].mxu0 %v584
        %v681 = vpop.f32.mrb[0].mxu0
        %v682 = vadd.f32 %v613, %v681
        %v683 = vpop.f32.mrb[0].mxu0
        %684 = vmatprep.mubr.f32.mxu0 0.0
        %685 = vmatmul.mubr.f32.gmra.mrb[0].mxu0 %v585
        %v686 = vpop.f32.mrb[0].mxu0
        %v687 = vadd.f32 %v613, %v686
        %v688 = vpop.f32.mrb[0].mxu0
        %689 = vmatprep.mubr.f32.mxu0 0.0
        %690 = vmatmul.mubr.f32.gmra.mrb[0].mxu0 %v586
        %v691 = vpop.f32.mrb[0].mxu0
        %v692 = vadd.f32 %v613, %v691
        %v693 = vpop.f32.mrb[0].mxu0
        %694 = vmatprep.mubr.f32.mxu0 0.0
        %695 = vmatmul.mubr.f32.gmra.mrb[0].mxu0 %v587
        %v696 = vpop.f32.mrb[0].mxu0
        %v697 = vadd.f32 %v613, %v696
        %v698 = vpop.f32.mrb[0].mxu0
        %699 = vmatprep.mubr.f32.mxu0 0.0
        %700 = vmatmul.mubr.f32.gmra.mrb[0].mxu0 %v588
        %v701 = vpop.f32.mrb[0].mxu0
        %v702 = vadd.f32 %v613, %v701
        %v703 = vpop.f32.mrb[0].mxu0
        %704 = vmatprep.mubr.f32.mxu0 0.0
        %705 = vmatmul.mubr.f32.gmra.mrb[0].mxu0 %v589
        %v706 = vpop.f32.mrb[0].mxu0
        %v707 = vadd.f32 %v613, %v706
        %v708 = vpop.f32.mrb[0].mxu0
        %709 = vmatprep.mubr.f32.mxu0 0.0
        %710 = vmatmul.mubr.f32.gmra.mrb[0].mxu0 %v590
        %v711 = vpop.f32.mrb[0].mxu0
        %v712 = vadd.f32 %v613, %v711
        %v713 = vpop.f32.mrb[0].mxu0
        %714 = vmatprep.mubr.f32.mxu0 0.0
        %715 = vmatmul.mubr.f32.gmra.mrb[0].mxu0 %v591
        %v716 = vpop.f32.mrb[0].mxu0
        %v717 = vadd.f32 %v613, %v716
        %v718 = vpop.f32.mrb[0].mxu0
        %719 = vdwg.mxu0
        %v720 = vld [vmem:[%s499] sm:$0xff]
        %v721 = vld [vmem:[%s499 + $0x8] sm:$0xff]
        %v722 = vld [vmem:[%s499 + $0x10] sm:$0xff]
        %v723 = vld [vmem:[%s499 + $0x18] sm:$0xff]
        %v724 = vld [vmem:[%s499 + $0x20] sm:$0xff]
        %v725 = vld [vmem:[%s499 + $0x28] sm:$0xff]
        %v726 = vld [vmem:[%s499 + $0x30] sm:$0xff]
        %v727 = vld [vmem:[%s499 + $0x38] sm:$0xff]
        %v728 = vld [vmem:[%s499 + $0x40] sm:$0xff]
        %v729 = vld [vmem:[%s499 + $0x48] sm:$0xff]
        %v730 = vld [vmem:[%s499 + $0x50] sm:$0xff]
        %v731 = vld [vmem:[%s499 + $0x58] sm:$0xff]
        %v732 = vld [vmem:[%s499 + $0x60] sm:$0xff]
        %v733 = vld [vmem:[%s499 + $0x68] sm:$0xff]
        %v734 = vld [vmem:[%s499 + $0x70] sm:$0xff]
        %v735 = vld [vmem:[%s499 + $0x78] sm:$0xff]
        %v736 = vld [vmem:[%s559] sm:$0x1]
        %v738 = vlaneseq
        %v739 = vshrl.u32 %v738, 7
        %v740 = vsub.s32 0, %v739
        %v741 = vrot.slane %v736, %v740
        %743 = vmatprep.subr.mxu0 0.0
        %744 = vmatpush1.msra.mxu0 %v720
        %745 = vmatprep.subr.mxu0 0.0
        %746 = vmatpush1.msra.mxu0 %v721
        %747 = vmatprep.subr.mxu0 0.0
        %748 = vmatpush1.msra.mxu0 %v722
        %749 = vmatprep.subr.mxu0 0.0
        %750 = vmatpush1.msra.mxu0 %v723
        %751 = vmatprep.subr.mxu0 0.0
        %752 = vmatpush1.msra.mxu0 %v724
        %753 = vmatprep.subr.mxu0 0.0
        %754 = vmatpush1.msra.mxu0 %v725
        %755 = vmatprep.subr.mxu0 0.0
        %756 = vmatpush1.msra.mxu0 %v726
        %757 = vmatprep.subr.mxu0 0.0
        %758 = vmatpush1.msra.mxu0 %v727
        %759 = vmatprep.subr.mxu0 0.0
        %760 = vmatpush1.msra.mxu0 %v728
        %761 = vmatprep.subr.mxu0 0.0
        %762 = vmatpush1.msra.mxu0 %v729
        %763 = vmatprep.subr.mxu0 0.0
        %764 = vmatpush1.msra.mxu0 %v730
        %765 = vmatprep.subr.mxu0 0.0
        %766 = vmatpush1.msra.mxu0 %v731
        %767 = vmatprep.subr.mxu0 0.0
        %768 = vmatpush1.msra.mxu0 %v732
        %769 = vmatprep.subr.mxu0 0.0
        %770 = vmatpush1.msra.mxu0 %v733
        %771 = vmatprep.subr.mxu0 0.0
        %772 = vmatpush1.msra.mxu0 %v734
        %773 = vmatprep.subr.mxu0 0.0
        %774 = vmatpush1.msra.mxu0 %v735
        %775 = vmatprep.subr.mxu0 0.0
        %776 = vmatpush1.msra.mxu0 0.0
        %777 = vmatprep.subr.mxu0 0.0
        %778 = vmatpush1.msra.mxu0 0.0
        %779 = vmatprep.subr.mxu0 0.0
        %780 = vmatpush1.msra.mxu0 0.0
        %781 = vmatprep.subr.mxu0 0.0
        %782 = vmatpush1.msra.mxu0 0.0
        %783 = vmatprep.subr.mxu0 0.0
        %784 = vmatpush1.msra.mxu0 0.0
        %785 = vmatprep.subr.mxu0 0.0
        %786 = vmatpush1.msra.mxu0 0.0
        %787 = vmatprep.subr.mxu0 0.0
        %788 = vmatpush1.msra.mxu0 0.0
        %789 = vmatprep.subr.mxu0 0.0
        %790 = vmatpush1.msra.mxu0 0.0
        %791 = vmatprep.subr.mxu0 0.0
        %792 = vmatpush1.msra.mxu0 0.0
        %793 = vmatprep.subr.mxu0 0.0
        %794 = vmatpush1.msra.mxu0 0.0
        %795 = vmatprep.subr.mxu0 0.0
        %796 = vmatpush1.msra.mxu0 0.0
        %797 = vmatprep.subr.mxu0 0.0
        %798 = vmatpush1.msra.mxu0 0.0
        %799 = vmatprep.subr.mxu0 0.0
        %800 = vmatpush1.msra.mxu0 0.0
        %801 = vmatprep.subr.mxu0 0.0
        %802 = vmatpush1.msra.mxu0 0.0
        %803 = vmatprep.subr.mxu0 0.0
        %804 = vmatpush1.msra.mxu0 0.0
        %805 = vmatprep.subr.mxu0 0.0
        %806 = vmatpush1.msra.mxu0 0.0
        %807 = vmatprep.mubr.f32.mxu0 0.0
        %808 = vmatmul.mubr.f32.gmra.mrb[0].mxu0 %v584
        %v809 = vpop.f32.mrb[0].mxu0
        %v810 = vadd.f32 %v741, %v809
        %v811 = vpop.f32.mrb[0].mxu0
        %812 = vmatprep.mubr.f32.mxu0 0.0
        %813 = vmatmul.mubr.f32.gmra.mrb[0].mxu0 %v585
        %v814 = vpop.f32.mrb[0].mxu0
        %v815 = vadd.f32 %v741, %v814
        %v816 = vpop.f32.mrb[0].mxu0
        %817 = vmatprep.mubr.f32.mxu0 0.0
        %818 = vmatmul.mubr.f32.gmra.mrb[0].mxu0 %v586
        %v819 = vpop.f32.mrb[0].mxu0
        %v820 = vadd.f32 %v741, %v819
        %v821 = vpop.f32.mrb[0].mxu0
        %822 = vmatprep.mubr.f32.mxu0 0.0
        %823 = vmatmul.mubr.f32.gmra.mrb[0].mxu0 %v587
        %v824 = vpop.f32.mrb[0].mxu0
        %v825 = vadd.f32 %v741, %v824
        %v826 = vpop.f32.mrb[0].mxu0
        %827 = vmatprep.mubr.f32.mxu0 0.0
        %828 = vmatmul.mubr.f32.gmra.mrb[0].mxu0 %v588
        %v829 = vpop.f32.mrb[0].mxu0
        %v830 = vadd.f32 %v741, %v829
        %v831 = vpop.f32.mrb[0].mxu0
        %832 = vmatprep.mubr.f32.mxu0 0.0
        %833 = vmatmul.mubr.f32.gmra.mrb[0].mxu0 %v589
        %v834 = vpop.f32.mrb[0].mxu0
        %v835 = vadd.f32 %v741, %v834
        %v836 = vpop.f32.mrb[0].mxu0
        %837 = vmatprep.mubr.f32.mxu0 0.0
        %838 = vmatmul.mubr.f32.gmra.mrb[0].mxu0 %v590
        %v839 = vpop.f32.mrb[0].mxu0
        %v840 = vadd.f32 %v741, %v839
        %v841 = vpop.f32.mrb[0].mxu0
        %842 = vmatprep.mubr.f32.mxu0 0.0
        %843 = vmatmul.mubr.f32.gmra.mrb[0].mxu0 %v591
        %v844 = vpop.f32.mrb[0].mxu0
        %v845 = vadd.f32 %v741, %v844
        %v846 = vpop.f32.mrb[0].mxu0
        %847 = vdwg.mxu0
        %v848 = vmul.f32 %v810, 0.5
        %v849 = vmul.f32 %v815, 0.5
        %v850 = vmul.f32 %v820, 0.5
        %v851 = vmul.f32 %v825, 0.5
        %v852 = vmul.f32 %v830, 0.5
        %v853 = vmul.f32 %v835, 0.5
        %v854 = vmul.f32 %v840, 0.5
        %v855 = vmul.f32 %v845, 0.5
        %v856 = vmul.f32 %v810, 0.70710677
        %v857 = vmul.f32 %v815, 0.70710677
        %v858 = vmul.f32 %v820, 0.70710677
        %v859 = vmul.f32 %v825, 0.70710677
        %v860 = vmul.f32 %v830, 0.70710677
        %v861 = vmul.f32 %v835, 0.70710677
        %v862 = vmul.f32 %v840, 0.70710677
        %v863 = vmul.f32 %v845, 0.70710677
        %v864 = verf.f32.pop %v856
        %v865 = verf.f32.pop %v857
        %v866 = verf.f32.pop %v858
        %v867 = verf.f32.pop %v859
        %v868 = verf.f32.pop %v860
        %v869 = verf.f32.pop %v861
        %v870 = verf.f32.pop %v862
        %v871 = verf.f32.pop %v863
        %v872 = vadd.f32 %v864, 1.0
        %v873 = vadd.f32 %v865, 1.0
        %v874 = vadd.f32 %v866, 1.0
        %v875 = vadd.f32 %v867, 1.0
        %v876 = vadd.f32 %v868, 1.0
        %v877 = vadd.f32 %v869, 1.0
        %v878 = vadd.f32 %v870, 1.0
        %v879 = vadd.f32 %v871, 1.0
        %v880 = vmul.f32 %v848, %v872
        %v881 = vmul.f32 %v849, %v873
        %v882 = vmul.f32 %v850, %v874
        %v883 = vmul.f32 %v851, %v875
        %v884 = vmul.f32 %v852, %v876
        %v885 = vmul.f32 %v853, %v877
        %v886 = vmul.f32 %v854, %v878
        %v887 = vmul.f32 %v855, %v879
        %v888 = vmul.f32 %v682, %v880
        %v889 = vmul.f32 %v687, %v881
        %v890 = vmul.f32 %v692, %v882
        %v891 = vmul.f32 %v697, %v883
        %v892 = vmul.f32 %v702, %v884
        %v893 = vmul.f32 %v707, %v885
        %v894 = vmul.f32 %v712, %v886
        %v895 = vmul.f32 %v717, %v887
        %v896 = vld [vmem:[#allocation2] sm:$0xff]
        %v897 = vld [vmem:[#allocation2 + $0x8] sm:$0xff]
        %v898 = vld [vmem:[#allocation2 + $0x10] sm:$0xff]
        %v899 = vld [vmem:[#allocation2 + $0x18] sm:$0xff]
        %v900 = vld [vmem:[#allocation2 + $0x20] sm:$0xff]
        %v901 = vld [vmem:[#allocation2 + $0x28] sm:$0xff]
        %v902 = vld [vmem:[#allocation2 + $0x30] sm:$0xff]
        %v903 = vld [vmem:[#allocation2 + $0x38] sm:$0xff]
        %v904 = vld [vmem:[%s564] sm:$0xff]
        %v905 = vld [vmem:[%s564 + $0x8] sm:$0xff]
        %v906 = vld [vmem:[%s564 + $0x10] sm:$0xff]
        %v907 = vld [vmem:[%s564 + $0x18] sm:$0xff]
        %v908 = vld [vmem:[%s564 + $0x20] sm:$0xff]
        %v909 = vld [vmem:[%s564 + $0x28] sm:$0xff]
        %v910 = vld [vmem:[%s564 + $0x30] sm:$0xff]
        %v911 = vld [vmem:[%s564 + $0x38] sm:$0xff]
        %v912 = vld [vmem:[%s564 + $0x40] sm:$0xff]
        %v913 = vld [vmem:[%s564 + $0x48] sm:$0xff]
        %v914 = vld [vmem:[%s564 + $0x50] sm:$0xff]
        %v915 = vld [vmem:[%s564 + $0x58] sm:$0xff]
        %v916 = vld [vmem:[%s564 + $0x60] sm:$0xff]
        %v917 = vld [vmem:[%s564 + $0x68] sm:$0xff]
        %v918 = vld [vmem:[%s564 + $0x70] sm:$0xff]
        %v919 = vld [vmem:[%s564 + $0x78] sm:$0xff]
        %920 = vmatprep.subr.mxu0 0.0
        %921 = vmatpush1.msra.mxu0 %v904
        %922 = vmatprep.subr.mxu0 0.0
        %923 = vmatpush1.msra.mxu0 %v905
        %924 = vmatprep.subr.mxu0 0.0
        %925 = vmatpush1.msra.mxu0 %v906
        %926 = vmatprep.subr.mxu0 0.0
        %927 = vmatpush1.msra.mxu0 %v907
        %928 = vmatprep.subr.mxu0 0.0
        %929 = vmatpush1.msra.mxu0 %v908
        %930 = vmatprep.subr.mxu0 0.0
        %931 = vmatpush1.msra.mxu0 %v909
        %932 = vmatprep.subr.mxu0 0.0
        %933 = vmatpush1.msra.mxu0 %v910
        %934 = vmatprep.subr.mxu0 0.0
        %935 = vmatpush1.msra.mxu0 %v911
        %936 = vmatprep.subr.mxu0 0.0
        %937 = vmatpush1.msra.mxu0 %v912
        %938 = vmatprep.subr.mxu0 0.0
        %939 = vmatpush1.msra.mxu0 %v913
        %940 = vmatprep.subr.mxu0 0.0
        %941 = vmatpush1.msra.mxu0 %v914
        %942 = vmatprep.subr.mxu0 0.0
        %943 = vmatpush1.msra.mxu0 %v915
        %944 = vmatprep.subr.mxu0 0.0
        %945 = vmatpush1.msra.mxu0 %v916
        %946 = vmatprep.subr.mxu0 0.0
        %947 = vmatpush1.msra.mxu0 %v917
        %948 = vmatprep.subr.mxu0 0.0
        %949 = vmatpush1.msra.mxu0 %v918
        %950 = vmatprep.subr.mxu0 0.0
        %951 = vmatpush1.msra.mxu0 %v919
        %952 = vmatprep.subr.mxu0 0.0
        %953 = vmatpush1.msra.mxu0 0.0
        %954 = vmatprep.subr.mxu0 0.0
        %955 = vmatpush1.msra.mxu0 0.0
        %956 = vmatprep.subr.mxu0 0.0
        %957 = vmatpush1.msra.mxu0 0.0
        %958 = vmatprep.subr.mxu0 0.0
        %959 = vmatpush1.msra.mxu0 0.0
        %960 = vmatprep.subr.mxu0 0.0
        %961 = vmatpush1.msra.mxu0 0.0
        %962 = vmatprep.subr.mxu0 0.0
        %963 = vmatpush1.msra.mxu0 0.0
        %964 = vmatprep.subr.mxu0 0.0
        %965 = vmatpush1.msra.mxu0 0.0
        %966 = vmatprep.subr.mxu0 0.0
        %967 = vmatpush1.msra.mxu0 0.0
        %968 = vmatprep.subr.mxu0 0.0
        %969 = vmatpush1.msra.mxu0 0.0
        %970 = vmatprep.subr.mxu0 0.0
        %971 = vmatpush1.msra.mxu0 0.0
        %972 = vmatprep.subr.mxu0 0.0
        %973 = vmatpush1.msra.mxu0 0.0
        %974 = vmatprep.subr.mxu0 0.0
        %975 = vmatpush1.msra.mxu0 0.0
        %976 = vmatprep.subr.mxu0 0.0
        %977 = vmatpush1.msra.mxu0 0.0
        %978 = vmatprep.subr.mxu0 0.0
        %979 = vmatpush1.msra.mxu0 0.0
        %980 = vmatprep.subr.mxu0 0.0
        %981 = vmatpush1.msra.mxu0 0.0
        %982 = vmatprep.subr.mxu0 0.0
        %983 = vmatpush1.msra.mxu0 0.0
        %984 = vmatprep.mubr.f32.mxu0 0.0
        %985 = vmatmul.mubr.f32.gmra.mrb[0].mxu0 %v888
        %v986 = vpop.f32.mrb[0].mxu0
        %v987 = vadd.f32 0.0, %v986
        %v988 = vpop.f32.mrb[0].mxu0
        %989 = vmatprep.mubr.f32.mxu0 0.0
        %990 = vmatmul.mubr.f32.gmra.mrb[0].mxu0 %v889
        %v991 = vpop.f32.mrb[0].mxu0
        %v992 = vadd.f32 0.0, %v991
        %v993 = vpop.f32.mrb[0].mxu0
        %994 = vmatprep.mubr.f32.mxu0 0.0
        %995 = vmatmul.mubr.f32.gmra.mrb[0].mxu0 %v890
        %v996 = vpop.f32.mrb[0].mxu0
        %v997 = vadd.f32 0.0, %v996
        %v998 = vpop.f32.mrb[0].mxu0
        %999 = vmatprep.mubr.f32.mxu0 0.0
        %1000 = vmatmul.mubr.f32.gmra.mrb[0].mxu0 %v891
        %v1001 = vpop.f32.mrb[0].mxu0
        %v1002 = vadd.f32 0.0, %v1001
        %v1003 = vpop.f32.mrb[0].mxu0
        %1004 = vmatprep.mubr.f32.mxu0 0.0
        %1005 = vmatmul.mubr.f32.gmra.mrb[0].mxu0 %v892
        %v1006 = vpop.f32.mrb[0].mxu0
        %v1007 = vadd.f32 0.0, %v1006
        %v1008 = vpop.f32.mrb[0].mxu0
        %1009 = vmatprep.mubr.f32.mxu0 0.0
        %1010 = vmatmul.mubr.f32.gmra.mrb[0].mxu0 %v893
        %v1011 = vpop.f32.mrb[0].mxu0
        %v1012 = vadd.f32 0.0, %v1011
        %v1013 = vpop.f32.mrb[0].mxu0
        %1014 = vmatprep.mubr.f32.mxu0 0.0
        %1015 = vmatmul.mubr.f32.gmra.mrb[0].mxu0 %v894
        %v1016 = vpop.f32.mrb[0].mxu0
        %v1017 = vadd.f32 0.0, %v1016
        %v1018 = vpop.f32.mrb[0].mxu0
        %1019 = vmatprep.mubr.f32.mxu0 0.0
        %1020 = vmatmul.mubr.f32.gmra.mrb[0].mxu0 %v895
        %v1021 = vpop.f32.mrb[0].mxu0
        %v1022 = vadd.f32 0.0, %v1021
        %v1023 = vpop.f32.mrb[0].mxu0
        %1024 = vdwg.mxu0
        %v1025 = vadd.f32 %v896, %v987
        %v1026 = vadd.f32 %v897, %v992
        %v1027 = vadd.f32 %v898, %v997
        %v1028 = vadd.f32 %v899, %v1002
        %v1029 = vadd.f32 %v900, %v1007
        %v1030 = vadd.f32 %v901, %v1012
        %v1031 = vadd.f32 %v902, %v1017
        %v1032 = vadd.f32 %v903, %v1022
        %1033 = vst [vmem:[#allocation2] sm:$0xff] %v1025
        %1034 = vst [vmem:[#allocation2 + $0x8] sm:$0xff] %v1026
        %1035 = vst [vmem:[#allocation2 + $0x10] sm:$0xff] %v1027
        %1036 = vst [vmem:[#allocation2 + $0x18] sm:$0xff] %v1028
        %1037 = vst [vmem:[#allocation2 + $0x20] sm:$0xff] %v1029
        %1038 = vst [vmem:[#allocation2 + $0x28] sm:$0xff] %v1030
        %1039 = vst [vmem:[#allocation2 + $0x30] sm:$0xff] %v1031
        %1040 = vst [vmem:[#allocation2 + $0x38] sm:$0xff] %v1032
        %p1041 = scmp.eq.s32.totalorder %s23, 3
        // Predicated region
        $region129: #{feed_forward_geglu.1} parent=115 // pred_check
          %p1042 = pneg %p1041
        $region130: #{feed_forward_geglu.1} parent=115 // pred_check_branch
          %1044 = sbr.rel (%p1042) target = $region132
        $region131: #{feed_forward_geglu.1} parent=115 // pred_region
          %v1045 = vld [vmem:[#allocation2] sm:$0xff]
          %v1046 = vld [vmem:[#allocation2 + $0x8] sm:$0xff]
          %v1047 = vld [vmem:[#allocation2 + $0x10] sm:$0xff]
          %v1048 = vld [vmem:[#allocation2 + $0x18] sm:$0xff]
          %v1049 = vld [vmem:[#allocation2 + $0x20] sm:$0xff]
          %v1050 = vld [vmem:[#allocation2 + $0x28] sm:$0xff]
          %v1051 = vld [vmem:[#allocation2 + $0x30] sm:$0xff]
          %v1052 = vld [vmem:[#allocation2 + $0x38] sm:$0xff]
          %v1053 = vld [vmem:[%s6] sm:$0x1]
          %v1055 = vlaneseq
          %v1056 = vshrl.u32 %v1055, 7
          %v1057 = vsub.s32 0, %v1056
          %v1058 = vrot.slane %v1053, %v1057
          %v1060 = vadd.f32 %v1045, %v1058
          %v1061 = vadd.f32 %v1046, %v1058
          %v1062 = vadd.f32 %v1047, %v1058
          %v1063 = vadd.f32 %v1048, %v1058
          %v1064 = vadd.f32 %v1049, %v1058
          %v1065 = vadd.f32 %v1050, %v1058
          %v1066 = vadd.f32 %v1051, %v1058
          %v1067 = vadd.f32 %v1052, %v1058
          %1068 = vst [vmem:[%s570] sm:$0xff] %v1060
          %1069 = vst [vmem:[%s570 + $0x8] sm:$0xff] %v1061
          %1070 = vst [vmem:[%s570 + $0x10] sm:$0xff] %v1062
          %1071 = vst [vmem:[%s570 + $0x18] sm:$0xff] %v1063
          %1072 = vst [vmem:[%s570 + $0x20] sm:$0xff] %v1064
          %1073 = vst [vmem:[%s570 + $0x28] sm:$0xff] %v1065
          %1074 = vst [vmem:[%s570 + $0x30] sm:$0xff] %v1066
          %1075 = vst [vmem:[%s570 + $0x38] sm:$0xff] %v1067
        $region132: #{feed_forward_geglu.1} parent=115 // pred_fallthru
          _
        %s1076 = smul.u32 8, %s22
        %p1077 = scmp.lt.s32.totalorder %s1076, 31
        %s1078 = scalar_select %p1077, %s1076, 31
        %s1079 = smul.addr %s1078, 8
        %s1080 = scalar_lea.vmem %s7, %s1079
        // Predicated region
        $region133: #{feed_forward_geglu.1} parent=115 // pred_check
          %p1081 = pneg %p225
        $region134: #{feed_forward_geglu.1} parent=115 // pred_check_branch
          %1083 = sbr.rel (%p1081) target = $region136
        $region135: #{feed_forward_geglu.1} parent=115 // pred_region
          %s1084 = smul.u32 8, %s22
        $region136: #{feed_forward_geglu.1} parent=115 // pred_fallthru
          _
      $region116: #{feed_forward_geglu.1} parent=5 // pred_fallthru
        _
      %p1085 = scmp.le.s32.totalorder 2, %s13
      // Predicated region
      $region137: #{feed_forward_geglu.1} parent=5 // pred_check
        %p1086 = pneg %p1085
      $region138: #{feed_forward_geglu.1} parent=5 // pred_check_branch
        %1088 = sbr.rel (%p1086) target = $region140
      $region139: #{feed_forward_geglu.1} parent=5 // pred_region
        %s1089 = ssub.s32 %s13, 2
        // Predicated region
        $region141: #{feed_forward_geglu.1} parent=139 // pred_check
          %p1090 = pneg %p231
        $region142: #{feed_forward_geglu.1} parent=139 // pred_check_branch
          %1092 = sbr.rel (%p1090) target = $region144
        $region143: #{feed_forward_geglu.1} parent=139 // pred_region
          %s1093 = smul.u32 8, %s24
          %p1094 = scmp.lt.s32.totalorder %s1093, 31
          %s1095 = scalar_select %p1094, %s1093, 31
          %s1096 = smul.addr %s1095, 8
          %s1097 = scalar_lea.vmem %s7, %s1096
        $region144: #{feed_forward_geglu.1} parent=139 // pred_fallthru
          _
      $region140: #{feed_forward_geglu.1} parent=5 // pred_fallthru
        _
    $region6: #{feed_forward_geglu.1} parent=1 // loop_footer
      %s17 = sadd.s32 1, %s13
    $region7: #{feed_forward_geglu.1} parent=1 // loop_footer_branch
      %12 = sbr.rel target = $region3
    $region8: #{feed_forward_geglu.1} parent=1 // loop_exit
      _

</llo_original>
